<compile_context>
chip_gen: v7x
topology: tpu7x:2x2x1
jax: 0.10.0
libtpu: 0.0.40
codegen_flags: <defaults>
</compile_context>

<pallas_src>
import functools

import jax
import jax.numpy as jnp
from jax.experimental import pallas as pl
from jax.experimental.pallas import tpu as pltpu


def _vmem_spec():
    return pl.BlockSpec(memory_space=pltpu.MemorySpace.VMEM)


# ----------------------------------------------------------------------------
# Pallas kernel: fused encoder projections + VAE head of EditVAE.forward
# ----------------------------------------------------------------------------
def edit_vae_fused_kernel(
    edit_feat_ref,                  # [B, 3E]      pooled edit-encoder embeddings
    e_ref,                          # [B, S, E]    `before` embeddings (per position)
    eps_ref,                        # [B, L]       standard-normal noise
    w_ref,                          # [R, 128]     packed weight+bias slab (see pack_fused_params)
    slab_ref,                       # [B, PAD]     packed, lane-dense head output
    full_ref,                       # [B, S, 2He]  per-position encoder hidden (full_h_t)
    *, L, Hd, He2, pad_width, r_w2, r_w3, r_b1, r_b2, r_b3,
):
    f32 = jnp.float32
    B, S, E = e_ref.shape
    threeE = edit_feat_ref.shape[1]
    K1 = threeE + E          # block-diag matmul-1 contraction dim
    N1 = 2 * He2             # block-diag matmul-1 output width (= 128 here)
    N2 = 2 * L + Hd          # block-diag matmul-2 output width ([mean|logvar|combo_enc])
    N3 = 2 * Hd              # matmul-3 output width ([rep | rep-part-of-init])

    # --- Static slices of the single packed weight slab (one input DMA). ----
    W1 = w_ref[0:K1, 0:N1]                    # [[w_edit, 0], [0, w_enc]]
    W2 = w_ref[r_w2:r_w2 + N1, 0:N2]          # [[w_ml, 0], [0, w_combo_enc]]
    W3 = w_ref[r_w3:r_w3 + L, 0:N3]           # [w_l2h | w_l2h @ w_combo_rep]
    b1 = w_ref[r_b1:r_b1 + 1, 0:N1]           # [b_edit | b_enc]
    b2 = w_ref[r_b2:r_b2 + 1, 0:N2]           # [b_ml | b_combo]
    b3 = w_ref[r_b3:r_b3 + 1, 0:N3]           # [b_l2h | b_l2h @ w_combo_rep]
    w_enc = w_ref[threeE:K1, He2:N1]          # re-read from W1's lower-right block
    b_enc = w_ref[r_b1:r_b1 + 1, He2:N1]

    # --- `before` encoder: per-position projection + in-kernel pooling. -----
    e3 = e_ref[...]                                                # [B, S, E]
    pooled = jnp.mean(e3, axis=1)                                  # [B, E]
    e_flat = e3.reshape(B * S, E)                                  # leading-dim collapse (layout-free)
    pre = jnp.dot(e_flat, w_enc, preferred_element_type=f32) + b_enc
    full_ref[...] = jnp.tanh(pre).reshape(B, S, He2)               # full_h_t

    # --- Block-diag matmul 1: edit & before projections in one MXU push. ----
    feat = jnp.concatenate([edit_feat_ref[...], pooled], axis=-1)  # [B, K1]
    h = jnp.tanh(jnp.dot(feat, W1, preferred_element_type=f32) + b1)   # [B, 128]
    # h[:, :He2*?]: lanes [0:2He) = edit_enc_hidden, lanes [2He:4He) = edit_minus_hidden

    # --- Block-diag matmul 2: [mean | logvar | combo_layer enc-part]. -------
    g = jnp.dot(h, W2, preferred_element_type=f32) + b2            # [B, 2L+Hd]
    mean = g[:, :L]
    logvar = g[:, L:2 * L]
    combo_enc = g[:, 2 * L:N2]                                     # enc_h @ w_combo_enc + b_combo

    # --- reparameterize: z = mu + eps * exp(0.5 * logvar) --------------------
    std = jnp.exp(0.5 * logvar)
    z = mean + eps_ref[...] * std

    # --- Matmul 3: rep (latent2hidden) and rep-contribution to init, fused. --
    o3 = jnp.dot(z, W3, preferred_element_type=f32) + b3           # [B, 2Hd]
    rep = o3[:, :Hd]                                               # dec_edit_repr
    init = combo_enc + o3[:, Hd:N3]                                # decoder_init_state

    # --- KL per row: -0.5 * sum(1 + logvar - mu^2 - exp(logvar), -1) ---------
    # exp(logvar) reuses std (var = std*std) -> no second EUP exp pass.
    var = std * std
    kl_per = -0.5 * jnp.sum(1.0 + logvar - mean * mean - var,
                            axis=-1, keepdims=True)                # [B, 1]

    # --- Single lane-dense packed store: [z|mean|logvar|rep|init|kl|pad]. ----
    pieces = [z, mean, logvar, rep, init, kl_per]
    used = 3 * L + 2 * Hd + 1
    npad = pad_width - used
    if npad > 0:
        pieces.append(jnp.zeros((B, npad), f32))
    slab_ref[...] = jnp.concatenate(pieces, axis=-1)


# ----------------------------------------------------------------------------
# One-time parameter packing (block-diag stacking + single weight/bias slab)
# ----------------------------------------------------------------------------
def pack_fused_params(proj, head, *, emb_dim, enc_hidden, dec_hidden, latent):
    E = emb_dim
    threeE = 3 * E
    He2 = 2 * enc_hidden
    L = latent
    Hd = dec_hidden
    K1 = threeE + E
    N1 = 2 * He2
    N2 = 2 * L + Hd
    N3 = 2 * Hd
    width = max(128, -(-max(N1, N2, N3) // 128) * 128)

    # Block-diag 1: [edit_feat | pooled] @ [[w_edit, 0], [0, w_enc]]
    W1 = jnp.zeros((K1, N1), jnp.float32)
    W1 = W1.at[:threeE, :He2].set(proj["w_edit"])
    W1 = W1.at[threeE:, He2:].set(proj["w_enc"])
    b1 = jnp.concatenate([proj["b_edit"], proj["b_enc"]], axis=1)

    # Block-diag 2: [edit_h | enc_h] @ [[w_ml, 0], [0, w_combo_enc]]
    W2 = jnp.zeros((N1, N2), jnp.float32)
    W2 = W2.at[:He2, :2 * L].set(head["w_ml"])
    W2 = W2.at[He2:, 2 * L:].set(head["w_combo_enc"])
    b2 = jnp.concatenate([head["b_ml"], head["b_combo"]], axis=1)

    # Matmul 3: z @ [w_l2h | w_l2h @ w_combo_rep]  (rep and its init contribution)
    W3 = jnp.concatenate(
        [head["w_l2h"], head["w_l2h"] @ head["w_combo_rep"]], axis=1)
    b3 = jnp.concatenate(
        [head["b_l2h"], head["b_l2h"] @ head["w_combo_rep"]], axis=1)

    r_w2 = K1
    r_w3 = r_w2 + N1
    r_b1 = r_w3 + L
    r_b2 = r_b1 + 1
    r_b3 = r_b2 + 1
    R = -(-(r_b3 + 1) // 8) * 8                     # sublane-aligned row count

    w_slab = jnp.zeros((R, width), jnp.float32)
    w_slab = w_slab.at[0:K1, 0:N1].set(W1)
    w_slab = w_slab.at[r_w2:r_w2 + N1, 0:N2].set(W2)
    w_slab = w_slab.at[r_w3:r_w3 + L, 0:N3].set(W3)
    w_slab = w_slab.at[r_b1, 0:N1].set(b1[0])
    w_slab = w_slab.at[r_b2, 0:N2].set(b2[0])
    w_slab = w_slab.at[r_b3, 0:N3].set(b3[0])

    used = 3 * L + 2 * Hd + 1                       # z,mean,logvar,rep,init,kl_per
    pad_width = max(128, -(-used // 128) * 128)

    return {
        "w_slab": w_slab,
        "kw": dict(L=L, Hd=Hd, He2=He2, pad_width=pad_width,
                   r_w2=r_w2, r_w3=r_w3, r_b1=r_b1, r_b2=r_b2, r_b3=r_b3),
    }


# ----------------------------------------------------------------------------
# Wrapper: fused Pallas call (4 input DMAs, 2 outputs)
# ----------------------------------------------------------------------------
def edit_vae_head(edit_feat, before_emb, eps, packed):
    """Returns (z, mean, logvar, dec_edit_repr, decoder_init_state, kl, full_h_t)."""
    B = edit_feat.shape[0]
    threeE = edit_feat.shape[1]
    _, S, E = before_emb.shape
    kw = packed["kw"]
    L, Hd, He2, pad_width = kw["L"], kw["Hd"], kw["He2"], kw["pad_width"]

    ins = (edit_feat, before_emb, eps, packed["w_slab"])

    flops = (2 * B * ((threeE + E) * 2 * He2 + 2 * He2 * (2 * L + Hd) + L * 2 * Hd)
             + 2 * B * S * E * He2)
    transcendentals = B * (2 * He2 + L) + B * S * He2
    bytes_accessed = (sum(int(x.size) * x.dtype.itemsize for x in ins)
                      + (B * pad_width + B * S * He2) * 4)

    slab, full_h_t = pl.pallas_call(
        functools.partial(edit_vae_fused_kernel, **kw),
        out_shape=(jax.ShapeDtypeStruct((B, pad_width), jnp.float32),
                   jax.ShapeDtypeStruct((B, S, He2), jnp.float32)),
        in_specs=[_vmem_spec() for _ in ins],
        out_specs=(_vmem_spec(), _vmem_spec()),
        cost_estimate=pl.CostEstimate(
            flops=flops, transcendentals=transcendentals,
            bytes_accessed=bytes_accessed),
    )(*ins)

    # Slab lane offsets must stay in sync with the packing order in the kernel.
    # TODO(synk): if downstream consumers become Pallas kernels, pass `slab`
    # through and slice with static lane offsets in-kernel instead.
    z = slab[:, :L]
    mean = slab[:, L:2 * L]
    logvar = slab[:, 2 * L:3 * L]
    rep = slab[:, 3 * L:3 * L + Hd]
    init = slab[:, 3 * L + Hd:3 * L + 2 * Hd]
    kl = jnp.mean(slab[:, 3 * L + 2 * Hd])          # batch mean finished in XLA
    return z, mean, logvar, rep, init, kl, full_h_t


# ----------------------------------------------------------------------------
# Plain-JAX reference for the same fused head (for correctness checking)
# ----------------------------------------------------------------------------
def edit_vae_head_reference(edit_feat, before_emb, eps, proj, head):
    L = head["w_l2h"].shape[0]
    pooled = before_emb.mean(axis=1)
    edit_h = jnp.tanh(edit_feat @ proj["w_edit"] + proj["b_edit"])
    enc_h = jnp.tanh(pooled @ proj["w_enc"] + proj["b_enc"])
    full_h_t = jnp.tanh(before_emb @ proj["w_enc"] + proj["b_enc"])
    ml = edit_h @ head["w_ml"] + head["b_ml"]
    mean, logvar = ml[:, :L], ml[:, L:]
    z = mean + eps * jnp.exp(0.5 * logvar)
    rep = z @ head["w_l2h"] + head["b_l2h"]
    init = enc_h @ head["w_combo_enc"] + rep @ head["w_combo_rep"] + head["b_combo"]
    kl = jnp.mean(-0.5 * jnp.sum(1.0 + logvar - mean ** 2 - jnp.exp(logvar), axis=-1))
    return z, mean, logvar, rep, init, kl, full_h_t


# ----------------------------------------------------------------------------
# Deterministic stand-ins for the external submodules (source not provided)
# ----------------------------------------------------------------------------
def lstm_vaencoder_pool(before_edit, after_edit, tags, emb):
    # TODO(synk): LSTM_VAEncoder source unavailable; mean-pooled embeddings; its
    # tanh projection to the 2*He hidden is fused into the Pallas kernel.
    eb = emb["edit_before"][before_edit].mean(axis=1)
    ea = emb["edit_after"][after_edit].mean(axis=1)
    et = emb["tags"][tags].mean(axis=1)
    return jnp.concatenate([eb, ea, et], axis=-1)          # [B, 3E]


def lstm_encoder_embed(before, emb):
    # TODO(synk): LSTM_Encoder source unavailable; embedding lookup only — the
    # mean-pooling, the pooled tanh projection, and the per-position tanh
    # projection (full_h_t) are all fused into the Pallas kernel.
    return emb["before"][before]                           # [B, S, E]


def edit_vae_forward(inputs, emb, packed, eps):
    """Mirrors EditVAE.forward (yin encoder, use_kl=True, bow_loss=False)."""
    edit_feat = lstm_vaencoder_pool(
        inputs["before_edit"], inputs["after_edit"], inputs["tags"], emb)
    before_emb = lstm_encoder_embed(inputs["before"], emb)

    (z, mean, logvar, dec_edit_repr, decoder_init_state, kl,
     edit_minus_full_h_t) = edit_vae_head(edit_feat, before_emb, eps, packed)

    # TODO(synk): EditDecoder (attentional LSTM decoder with teacher forcing)
    # source not provided; recon loss / predictions / ppl are placeholders.
    decoder_loss = jnp.float32(0.0)
    predictions = None
    ppl = jnp.float32(0.0)

    return_dict = {
        "preds": predictions,
        "loss": {"bow": 0, "recon": decoder_loss},
        "KLD": kl,
        # Kept as a device scalar: float() would force a blocking device->host
        # transfer every step (kills async dispatch); convert lazily if needed.
        "KLD_item": kl,
        "PPL": ppl,
    }
    aux = dict(
        edit_feat=edit_feat,
        before_emb=before_emb,
        edit_minus_full_h_t=edit_minus_full_h_t,
        z=z, mean=mean, logvar=logvar,
        decoder_init_state=decoder_init_state,
        kl=kl,
    )
    return return_dict, dec_edit_repr, aux


# ----------------------------------------------------------------------------
# Deterministic parameter construction
# ----------------------------------------------------------------------------
def make_params(key, *, vocab, emb_dim, enc_hidden, dec_hidden, latent):
    ks = jax.random.split(key, 18)
    He2 = 2 * enc_hidden
    scale = 0.05

    emb = {
        "edit_before": scale * jax.random.normal(ks[0], (vocab, emb_dim), jnp.float32),
        "edit_after":  scale * jax.random.normal(ks[1], (vocab, emb_dim), jnp.float32),
        "tags":        scale * jax.random.normal(ks[2], (vocab, emb_dim), jnp.float32),
        "before":      scale * jax.random.normal(ks[3], (vocab, emb_dim), jnp.float32),
        "after":       scale * jax.random.normal(ks[4], (vocab, emb_dim), jnp.float32),
    }
    proj = {
        "w_edit": scale * jax.random.normal(ks[5], (3 * emb_dim, He2), jnp.float32),
        "b_edit": jnp.zeros((1, He2), jnp.float32),
        "w_enc":  scale * jax.random.normal(ks[6], (emb_dim, He2), jnp.float32),
        "b_enc":  jnp.zeros((1, He2), jnp.float32),
    }
    # Linear weights stored directly as [in, out] (equivalent to torch W.T).
    w_mean = scale * jax.random.normal(ks[7], (He2, latent), jnp.float32)
    b_mean = scale * jax.random.normal(ks[8], (1, latent), jnp.float32)
    w_logvar = scale * jax.random.normal(ks[9], (He2, latent), jnp.float32)
    b_logvar = scale * jax.random.normal(ks[10], (1, latent), jnp.float32)
    head = {
        # mean_layer / logvar_layer stacked into one [2He, 2L] weight (fed to
        # the block-diag W2 in pack_fused_params).
        "w_ml": jnp.concatenate([w_mean, w_logvar], axis=1),
        "b_ml": jnp.concatenate([b_mean, b_logvar], axis=1),
        "w_l2h":       scale * jax.random.normal(ks[11], (latent, dec_hidden), jnp.float32),
        "b_l2h":       scale * jax.random.normal(ks[12], (1, dec_hidden), jnp.float32),
        # combo_layer weight [2*He + Hd, Hd] split into its two concat blocks.
        "w_combo_enc": scale * jax.random.normal(ks[13], (He2, dec_hidden), jnp.float32),
        "w_combo_rep": scale * jax.random.normal(ks[14], (dec_hidden, dec_hidden), jnp.float32),
        "b_combo":     scale * jax.random.normal(ks[15], (1, dec_hidden), jnp.float32),
    }
    return emb, proj, head


if __name__ == "__main__":
    B = 8
    S_EDIT = 8
    S_BEFORE = 8
    VOCAB = 64
    EMB = 16
    ENC_HIDDEN = 32      # encoder_hidden; bi-directional hidden => 64
    DEC_HIDDEN = 32
    LATENT = 16

    root = jax.random.PRNGKey(0)
    k_par, k_ids, k_eps = jax.random.split(root, 3)
    emb, proj, head_params = make_params(
        k_par, vocab=VOCAB, emb_dim=EMB,
        enc_hidden=ENC_HIDDEN, dec_hidden=DEC_HIDDEN, latent=LATENT,
    )
    packed = pack_fused_params(
        proj, head_params, emb_dim=EMB,
        enc_hidden=ENC_HIDDEN, dec_hidden=DEC_HIDDEN, latent=LATENT,
    )

    ki = jax.random.split(k_ids, 5)
    inputs = {
        "before_edit": jax.random.randint(ki[0], (B, S_EDIT), 0, VOCAB),
        "after_edit":  jax.random.randint(ki[1], (B, S_EDIT), 0, VOCAB),
        "tags":        jax.random.randint(ki[2], (B, S_EDIT), 0, VOCAB),
        "before":      jax.random.randint(ki[3], (B, S_BEFORE), 0, VOCAB),
        "after":       jax.random.randint(ki[4], (B, S_BEFORE), 0, VOCAB),
    }
    eps = jax.random.normal(k_eps, (B, LATENT), jnp.float32)

    return_dict, dec_edit_repr, aux = edit_vae_forward(inputs, emb, packed, eps)
    jax.block_until_ready(dec_edit_repr)

    # Correctness check of the fused Pallas head against a plain-JAX reference.
    z_r, mean_r, logvar_r, rep_r, init_r, kl_r, full_r = edit_vae_head_reference(
        aux["edit_feat"], aux["before_emb"], eps, proj, head_params)
    assert jnp.allclose(aux["z"], z_r, atol=1e-4, rtol=1e-4), "z mismatch"
    assert jnp.allclose(aux["mean"], mean_r, atol=1e-4, rtol=1e-4), "mean mismatch"
    assert jnp.allclose(aux["logvar"], logvar_r, atol=1e-4, rtol=1e-4), "logvar mismatch"
    assert jnp.allclose(dec_edit_repr, rep_r, atol=1e-4, rtol=1e-4), "dec_edit_repr mismatch"
    assert jnp.allclose(aux["decoder_init_state"], init_r, atol=1e-4, rtol=1e-4), "init mismatch"
    assert jnp.allclose(aux["edit_minus_full_h_t"], full_r, atol=1e-4, rtol=1e-4), "full_h_t mismatch"
    assert jnp.allclose(aux["kl"], kl_r, atol=1e-4, rtol=1e-4), "KL mismatch"

    print("KERNEL_OK")
</pallas_src>

<mosaic_0001>
module attributes {stable_mosaic.version = 11 : i64} {
  func.func @edit_vae_fused_kernel(%arg0: memref<8x48xf32, #tpu.memory_space<vmem>>, %arg1: memref<8x8x16xf32, #tpu.memory_space<vmem>>, %arg2: memref<8x16xf32, #tpu.memory_space<vmem>>, %arg3: memref<216x128xf32, #tpu.memory_space<vmem>>, %arg4: memref<8x128xf32, #tpu.memory_space<vmem>>, %arg5: memref<8x8x64xf32, #tpu.memory_space<vmem>>) attributes {dimension_semantics = [], scalar_prefetch = 0 : i64, scratch_operands = 0 : i64, tpu.core_type = #tpu.core_type<tc>} {
    %c0 = arith.constant 0 : index
    %c0_0 = arith.constant 0 : index
    %0 = vector.load %arg3[%c0, %c0_0] : memref<216x128xf32, #tpu.memory_space<vmem>>, vector<64x128xf32>
    %c64 = arith.constant 64 : index
    %c0_1 = arith.constant 0 : index
    %1 = vector.load %arg3[%c64, %c0_1] : memref<216x128xf32, #tpu.memory_space<vmem>>, vector<128x64xf32>
    %c192 = arith.constant 192 : index
    %c0_2 = arith.constant 0 : index
    %2 = vector.load %arg3[%c192, %c0_2] : memref<216x128xf32, #tpu.memory_space<vmem>>, vector<16x64xf32>
    %c208 = arith.constant 208 : index
    %c0_3 = arith.constant 0 : index
    %3 = vector.load %arg3[%c208, %c0_3] : memref<216x128xf32, #tpu.memory_space<vmem>>, vector<1x128xf32>
    %c209 = arith.constant 209 : index
    %c0_4 = arith.constant 0 : index
    %4 = vector.load %arg3[%c209, %c0_4] : memref<216x128xf32, #tpu.memory_space<vmem>>, vector<1x64xf32>
    %c210 = arith.constant 210 : index
    %c0_5 = arith.constant 0 : index
    %5 = vector.load %arg3[%c210, %c0_5] : memref<216x128xf32, #tpu.memory_space<vmem>>, vector<1x64xf32>
    %c48 = arith.constant 48 : index
    %c64_6 = arith.constant 64 : index
    %6 = vector.load %arg3[%c48, %c64_6] : memref<216x128xf32, #tpu.memory_space<vmem>>, vector<16x64xf32>
    %c208_7 = arith.constant 208 : index
    %c64_8 = arith.constant 64 : index
    %7 = vector.load %arg3[%c208_7, %c64_8] : memref<216x128xf32, #tpu.memory_space<vmem>>, vector<1x64xf32>
    %c0_9 = arith.constant 0 : index
    %c0_10 = arith.constant 0 : index
    %c0_11 = arith.constant 0 : index
    %8 = vector.load %arg1[%c0_9, %c0_10, %c0_11] : memref<8x8x16xf32, #tpu.memory_space<vmem>>, vector<8x8x16xf32>
    %cst = arith.constant dense<0.000000e+00> : vector<8x16xf32>
    %9 = vector.multi_reduction <add>, %8, %cst [1] : vector<8x8x16xf32> to vector<8x16xf32>
    %cst_12 = arith.constant 8.000000e+00 : f32
    %10 = vector.broadcast %cst_12 : f32 to vector<8x16xf32>
    %11 = arith.divf %9, %10 : vector<8x16xf32>
    %12 = vector.shape_cast %8 : vector<8x8x16xf32> to vector<64x16xf32>
    %cst_13 = arith.constant dense<0.000000e+00> : vector<64x64xf32>
    %13 = tpu.matmul %12, %6, %cst_13 {dimension_numbers = #tpu.dot_dimension_numbers<[1], [0], [0], [1], [0, 0, 1, 1], [], []>} : vector<64x16xf32>, vector<16x64xf32>, vector<64x64xf32> -> vector<64x64xf32>
    %14 = vector.broadcast %7 : vector<1x64xf32> to vector<64x64xf32>
    %15 = arith.addf %13, %14 : vector<64x64xf32>
    %16 = math.tanh %15 : vector<64x64xf32>
    %17 = vector.shape_cast %16 : vector<64x64xf32> to vector<8x8x64xf32>
    %c0_14 = arith.constant 0 : index
    %c0_15 = arith.constant 0 : index
    %c0_16 = arith.constant 0 : index
    %18 = vector.load %arg5[%c0_14, %c0_15, %c0_16] : memref<8x8x64xf32, #tpu.memory_space<vmem>>, vector<8x8x64xf32>
    tpu.vector_store %arg5[%c0_14, %c0_15, %c0_16], %17 {strides = array<i32>} : memref<8x8x64xf32, #tpu.memory_space<vmem>>, vector<8x8x64xf32>,
    %c0_17 = arith.constant 0 : index
    %c0_18 = arith.constant 0 : index
    %19 = vector.load %arg0[%c0_17, %c0_18] : memref<8x48xf32, #tpu.memory_space<vmem>>, vector<8x48xf32>
    %20 = tpu.concatenate %19, %11 in 1 : vector<8x48xf32>, vector<8x16xf32> -> vector<8x64xf32>
    %cst_19 = arith.constant dense<0.000000e+00> : vector<8x128xf32>
    %21 = tpu.matmul %20, %0, %cst_19 {dimension_numbers = #tpu.dot_dimension_numbers<[1], [0], [0], [1], [0, 0, 1, 1], [], []>} : vector<8x64xf32>, vector<64x128xf32>, vector<8x128xf32> -> vector<8x128xf32>
    %22 = vector.broadcast %3 : vector<1x128xf32> to vector<8x128xf32>
    %23 = arith.addf %21, %22 : vector<8x128xf32>
    %24 = math.tanh %23 : vector<8x128xf32>
    %cst_20 = arith.constant dense<0.000000e+00> : vector<8x64xf32>
    %25 = tpu.matmul %24, %1, %cst_20 {dimension_numbers = #tpu.dot_dimension_numbers<[1], [0], [0], [1], [0, 0, 1, 1], [], []>} : vector<8x128xf32>, vector<128x64xf32>, vector<8x64xf32> -> vector<8x64xf32>
    %26 = vector.broadcast %4 : vector<1x64xf32> to vector<8x64xf32>
    %27 = arith.addf %25, %26 : vector<8x64xf32>
    %28 = vector.extract_strided_slice %27 {offsets = [0, 0], sizes = [8, 16], strides = [1, 1]} : vector<8x64xf32> to vector<8x16xf32>
    %29 = vector.extract_strided_slice %27 {offsets = [0, 16], sizes = [8, 16], strides = [1, 1]} : vector<8x64xf32> to vector<8x16xf32>
    %30 = vector.extract_strided_slice %27 {offsets = [0, 32], sizes = [8, 32], strides = [1, 1]} : vector<8x64xf32> to vector<8x32xf32>
    %cst_21 = arith.constant 5.000000e-01 : f32
    %31 = vector.broadcast %cst_21 : f32 to vector<8x16xf32>
    %32 = arith.mulf %31, %29 : vector<8x16xf32>
    %33 = math.exp %32 : vector<8x16xf32>
    %c0_22 = arith.constant 0 : index
    %c0_23 = arith.constant 0 : index
    %34 = vector.load %arg2[%c0_22, %c0_23] : memref<8x16xf32, #tpu.memory_space<vmem>>, vector<8x16xf32>
    %35 = arith.mulf %34, %33 : vector<8x16xf32>
    %36 = arith.addf %28, %35 : vector<8x16xf32>
    %cst_24 = arith.constant dense<0.000000e+00> : vector<8x64xf32>
    %37 = tpu.matmul %36, %2, %cst_24 {dimension_numbers = #tpu.dot_dimension_numbers<[1], [0], [0], [1], [0, 0, 1, 1], [], []>} : vector<8x16xf32>, vector<16x64xf32>, vector<8x64xf32> -> vector<8x64xf32>
    %38 = vector.broadcast %5 : vector<1x64xf32> to vector<8x64xf32>
    %39 = arith.addf %37, %38 : vector<8x64xf32>
    %40 = vector.extract_strided_slice %39 {offsets = [0, 0], sizes = [8, 32], strides = [1, 1]} : vector<8x64xf32> to vector<8x32xf32>
    %41 = vector.extract_strided_slice %39 {offsets = [0, 32], sizes = [8, 32], strides = [1, 1]} : vector<8x64xf32> to vector<8x32xf32>
    %42 = arith.addf %30, %41 : vector<8x32xf32>
    %43 = arith.mulf %33, %33 : vector<8x16xf32>
    %cst_25 = arith.constant 1.000000e+00 : f32
    %44 = vector.broadcast %cst_25 : f32 to vector<8x16xf32>
    %45 = arith.addf %44, %29 : vector<8x16xf32>
    %46 = arith.mulf %28, %28 : vector<8x16xf32>
    %47 = arith.subf %45, %46 : vector<8x16xf32>
    %48 = arith.subf %47, %43 : vector<8x16xf32>
    %cst_26 = arith.constant dense<0.000000e+00> : vector<8xf32>
    %49 = vector.multi_reduction <add>, %48, %cst_26 [1] : vector<8x16xf32> to vector<8xf32>
    %50 = vector.shape_cast %49 : vector<8xf32> to vector<8x1xf32>
    %cst_27 = arith.constant -5.000000e-01 : f32
    %51 = vector.broadcast %cst_27 : f32 to vector<8x1xf32>
    %52 = arith.mulf %51, %50 : vector<8x1xf32>
    %cst_28 = arith.constant 0.000000e+00 : f32
    %53 = vector.broadcast %cst_28 : f32 to vector<8x15xf32>
    %54 = tpu.concatenate %36, %28, %29, %40, %42, %52, %53 in 1 : vector<8x16xf32>, vector<8x16xf32>, vector<8x16xf32>, vector<8x32xf32>, vector<8x32xf32>, vector<8x1xf32>, vector<8x15xf32> -> vector<8x128xf32>
    %c0_29 = arith.constant 0 : index
    %c0_30 = arith.constant 0 : index
    %55 = vector.load %arg4[%c0_29, %c0_30] : memref<8x128xf32, #tpu.memory_space<vmem>>, vector<8x128xf32>
    tpu.vector_store %arg4[%c0_29, %c0_30], %54 {strides = array<i32>} : memref<8x128xf32, #tpu.memory_space<vmem>>, vector<8x128xf32>,
    return
  }
}

</mosaic_0001>

<llo_original>
// kernel: tpu_custom_call.1
$region0: #{tpu_custom_call.1}
  #allocation0 [shape = 'u32[]', space=smem, size = 0x4, offset = 0x4, fixed_abs, tag = 'smem constant byte address 0x4 - core index']
  #allocation1 [shape = 'u32[144,128]{1,0:T(1,128)}', space=vmem, size = 0x12000, scoped, tag = 'internal scratch']
  %s0 = inlined_call_operand.hbm [shape: f32[8,48], index: 0, kind: input, shape index: {}]
  %s1 = inlined_call_operand.hbm [shape: f32[8,8,16], index: 1, kind: input, shape index: {}]
  %s2 = inlined_call_operand.hbm [shape: f32[8,16], index: 2, kind: input, shape index: {}]
  %s3 = inlined_call_operand.hbm [shape: f32[216,128], index: 3, kind: input, shape index: {}]
  %s4 = inlined_call_operand.hbm [shape: f32[8,128], index: 4, kind: output, shape index: {0}]
  %s5 = inlined_call_operand.hbm [shape: f32[8,8,64], index: 5, kind: output, shape index: {1}]
  %6 = xla_tuple %s4, %s5
  %s7 = sld [smem:[#allocation0]]
  $region50: #{tpu_custom_call.1} parent=0
    _
  %s9 = ssub.s32 1, %s7
  %s10 = scalar_select 0, %s9, %s7
  $region1: #{tpu_custom_call.1} parent=0
    #allocation2 [shape = 'u8[4096]{0}', space=vmem, size = 0x1000, scoped, tag = 'input window, operand 0, single buffered']
    #allocation3 [shape = 's32[1]{0}', space=sflag, size = 0x4, scoped, tag = 'scoped memory for tpu_custom_call.1']
    #allocation4 [shape = 's32[1]{0}', space=sflag, size = 0x4, scoped, tag = 'scoped memory for tpu_custom_call.1']
    #allocation5 [shape = 'u8[32768]{0}', space=vmem, size = 0x8000, scoped, tag = 'input window, operand 1, single buffered']
    #allocation6 [shape = 's32[1]{0}', space=sflag, size = 0x4, scoped, tag = 'scoped memory for tpu_custom_call.1']
    #allocation7 [shape = 'u8[4096]{0}', space=vmem, size = 0x1000, scoped, tag = 'input window, operand 2, single buffered']
    #allocation8 [shape = 'u8[110592]{0}', space=vmem, size = 0x1b000, scoped, tag = 'input window, operand 3, single buffered']
    #allocation9 [shape = 's32[1]{0}', space=sflag, size = 0x4, scoped, tag = 'scoped memory for tpu_custom_call.1']
    #allocation10 [shape = 'u8[4096]{0}', space=vmem, size = 0x1000, scoped, tag = 'output window, operand 0, single buffered']
    #allocation11 [shape = 'u8[32768]{0}', space=vmem, size = 0x8000, scoped, tag = 'output window, operand 1, single buffered']
    #allocation12 [shape = 's32[1]{0}', space=sflag, size = 0x4, scoped, tag = 'scoped memory for tpu_custom_call.1']
    %11 = vsyncpa [#allocation3], 0
    %12 = vsyncpa [#allocation6], 0
    %13 = vsyncpa [#allocation9], 0
    %14 = vsyncpa [#allocation4], 0
    %15 = vsyncpa [#allocation12], 0
    // Predicated region
    $region2: #{tpu_custom_call.1} parent=1 // pred_check
      _
    $region3: #{tpu_custom_call.1} parent=1 // pred_check_branch
      %17 = sbr.rel (0) target = $region5
    $region4: #{tpu_custom_call.1} parent=1 // pred_region
      %s19 = ssub.s32 128, 128
      %20 = vsyncadd [#allocation3], %s19
      %s22 = sshll.u32 [#allocation2], 4
      %s23 = int_to_ptr.vmem [resolvable:$true] %s22
      %25 = dma.hbm_to_vmem [thread:$0]  %s0, 128, %s23, [#allocation3]
    $region5: #{tpu_custom_call.1} parent=1 // pred_fallthru
      _
    // Predicated region
    $region6: #{tpu_custom_call.1} parent=1 // pred_check
      _
    $region7: #{tpu_custom_call.1} parent=1 // pred_check_branch
      %27 = sbr.rel (0) target = $region9
    $region8: #{tpu_custom_call.1} parent=1 // pred_region
      %s29 = ssub.s32 1024, 1024
      %30 = vsyncadd [#allocation6], %s29
      %s31 = sshll.u32 [#allocation5], 4
      %s32 = int_to_ptr.vmem [resolvable:$true] %s31
      %37 = dma.hbm_to_vmem [thread:$0]  %s1, 1024, %s32, [#allocation6], 128, 128, 8
    $region9: #{tpu_custom_call.1} parent=1 // pred_fallthru
      _
    // Predicated region
    $region10: #{tpu_custom_call.1} parent=1 // pred_check
      _
    $region11: #{tpu_custom_call.1} parent=1 // pred_check_branch
      %39 = sbr.rel (0) target = $region13
    $region12: #{tpu_custom_call.1} parent=1 // pred_region
      %s41 = ssub.s32 128, 128
      %42 = vsyncadd [#allocation6], %s41
      %s44 = sshll.u32 [#allocation7], 4
      %s45 = int_to_ptr.vmem [resolvable:$true] %s44
      %47 = dma.hbm_to_vmem [thread:$0]  %s2, 128, %s45, [#allocation6]
    $region13: #{tpu_custom_call.1} parent=1 // pred_fallthru
      _
    // Predicated region
    $region14: #{tpu_custom_call.1} parent=1 // pred_check
      _
    $region15: #{tpu_custom_call.1} parent=1 // pred_check_branch
      %49 = sbr.rel (0) target = $region17
    $region16: #{tpu_custom_call.1} parent=1 // pred_region
      %s51 = ssub.s32 3456, 3456
      %52 = vsyncadd [#allocation9], %s51
      %s53 = sshll.u32 [#allocation8], 4
      %s54 = int_to_ptr.vmem [resolvable:$true] %s53
      %59 = dma.hbm_to_vmem [thread:$0]  %s3, 3456, %s54, [#allocation9], 128, 128, 8
    $region17: #{tpu_custom_call.1} parent=1 // pred_fallthru
      _
    // Predicated region
    $region18: #{tpu_custom_call.1} parent=1 // pred_check
      _
    $region19: #{tpu_custom_call.1} parent=1 // pred_check_branch
      %61 = sbr.rel (0) target = $region21
    $region20: #{tpu_custom_call.1} parent=1 // pred_region
      %62 = dma.done [#allocation3], 128
    $region21: #{tpu_custom_call.1} parent=1 // pred_fallthru
      _
    // Predicated region
    $region22: #{tpu_custom_call.1} parent=1 // pred_check
      _
    $region23: #{tpu_custom_call.1} parent=1 // pred_check_branch
      %64 = sbr.rel (0) target = $region25
    $region24: #{tpu_custom_call.1} parent=1 // pred_region
      %65 = dma.done [#allocation6], 1024
    $region25: #{tpu_custom_call.1} parent=1 // pred_fallthru
      _
    // Predicated region
    $region26: #{tpu_custom_call.1} parent=1 // pred_check
      _
    $region27: #{tpu_custom_call.1} parent=1 // pred_check_branch
      %67 = sbr.rel (0) target = $region29
    $region28: #{tpu_custom_call.1} parent=1 // pred_region
      %68 = dma.done [#allocation6], 128
    $region29: #{tpu_custom_call.1} parent=1 // pred_fallthru
      _
    // Predicated region
    $region30: #{tpu_custom_call.1} parent=1 // pred_check
      _
    $region31: #{tpu_custom_call.1} parent=1 // pred_check_branch
      %70 = sbr.rel (0) target = $region33
    $region32: #{tpu_custom_call.1} parent=1 // pred_region
      %71 = dma.done [#allocation9], 3456
    $region33: #{tpu_custom_call.1} parent=1 // pred_fallthru
      _
    %v72 = vld [vmem:[#allocation8] sm:$0xff]
    %v73 = vld [vmem:[#allocation8 + $0x8] sm:$0xff]
    %v74 = vld [vmem:[#allocation8 + $0x10] sm:$0xff]
    %v75 = vld [vmem:[#allocation8 + $0x18] sm:$0xff]
    %v76 = vld [vmem:[#allocation8 + $0x20] sm:$0xff]
    %v77 = vld [vmem:[#allocation8 + $0x28] sm:$0xff]
    %v78 = vld [vmem:[#allocation8 + $0x30] sm:$0xff]
    %v79 = vld [vmem:[#allocation8 + $0x38] sm:$0xff]
    %v80 = vld [vmem:[#allocation8 + $0x40] sm:$0xff]
    %v81 = vld [vmem:[#allocation8 + $0x48] sm:$0xff]
    %v82 = vld [vmem:[#allocation8 + $0x50] sm:$0xff]
    %v83 = vld [vmem:[#allocation8 + $0x58] sm:$0xff]
    %v84 = vld [vmem:[#allocation8 + $0x60] sm:$0xff]
    %v85 = vld [vmem:[#allocation8 + $0x68] sm:$0xff]
    %v86 = vld [vmem:[#allocation8 + $0x70] sm:$0xff]
    %v87 = vld [vmem:[#allocation8 + $0x78] sm:$0xff]
    %v88 = vld [vmem:[#allocation8 + $0x80] sm:$0xff]
    %v89 = vld [vmem:[#allocation8 + $0x88] sm:$0xff]
    %v90 = vld [vmem:[#allocation8 + $0x90] sm:$0xff]
    %v91 = vld [vmem:[#allocation8 + $0x98] sm:$0xff]
    %v92 = vld [vmem:[#allocation8 + $0xa0] sm:$0xff]
    %v93 = vld [vmem:[#allocation8 + $0xa8] sm:$0xff]
    %v94 = vld [vmem:[#allocation8 + $0xb0] sm:$0xff]
    %v95 = vld [vmem:[#allocation8 + $0xb8] sm:$0xff]
    %v96 = vld [vmem:[#allocation8 + $0xc0] sm:$0xff]
    %v97 = vld [vmem:[#allocation8 + $0xc8] sm:$0xff]
    %v98 = vld [vmem:[#allocation8 + $0xd0] sm:$0x1]
    %v99 = vld [vmem:[#allocation8 + $0xd1] sm:$0x1]
    %v100 = vld [vmem:[#allocation8 + $0xd2] sm:$0x1]
    %v101 = vld [vmem:[#allocation5] sm:$0xff]
    %v102 = vld [vmem:[#allocation5 + $0x8] sm:$0xff]
    %v103 = vld [vmem:[#allocation5 + $0x10] sm:$0xff]
    %v104 = vld [vmem:[#allocation5 + $0x18] sm:$0xff]
    %v105 = vld [vmem:[#allocation5 + $0x20] sm:$0xff]
    %v106 = vld [vmem:[#allocation5 + $0x28] sm:$0xff]
    %v107 = vld [vmem:[#allocation5 + $0x30] sm:$0xff]
    %v108 = vld [vmem:[#allocation5 + $0x38] sm:$0xff]
    %vm109 = vcmask 130048
    %v110 = vsel %vm109, %v101, 0.0
    %v111 = vrot.slane %v110, 4
    %v112 = vadd.f32 %v110, %v111
    %v113 = vrot.slane %v112, 2
    %v114 = vadd.f32 %v112, %v113
    %v115 = vrot.slane %v114, 1
    %v116 = vadd.f32 %v114, %v115
    %v117 = vsel %vm109, %v102, 0.0
    %v118 = vrot.slane %v117, 4
    %v119 = vadd.f32 %v117, %v118
    %v120 = vrot.slane %v119, 2
    %v121 = vadd.f32 %v119, %v120
    %v122 = vrot.slane %v121, 1
    %v123 = vadd.f32 %v121, %v122
    %v124 = vsel %vm109, %v103, 0.0
    %v125 = vrot.slane %v124, 4
    %v126 = vadd.f32 %v124, %v125
    %v127 = vrot.slane %v126, 2
    %v128 = vadd.f32 %v126, %v127
    %v129 = vrot.slane %v128, 1
    %v130 = vadd.f32 %v128, %v129
    %v131 = vsel %vm109, %v104, 0.0
    %v132 = vrot.slane %v131, 4
    %v133 = vadd.f32 %v131, %v132
    %v134 = vrot.slane %v133, 2
    %v135 = vadd.f32 %v133, %v134
    %v136 = vrot.slane %v135, 1
    %v137 = vadd.f32 %v135, %v136
    %v138 = vsel %vm109, %v105, 0.0
    %v139 = vrot.slane %v138, 4
    %v140 = vadd.f32 %v138, %v139
    %v141 = vrot.slane %v140, 2
    %v142 = vadd.f32 %v140, %v141
    %v143 = vrot.slane %v142, 1
    %v144 = vadd.f32 %v142, %v143
    %v145 = vsel %vm109, %v106, 0.0
    %v146 = vrot.slane %v145, 4
    %v147 = vadd.f32 %v145, %v146
    %v148 = vrot.slane %v147, 2
    %v149 = vadd.f32 %v147, %v148
    %v150 = vrot.slane %v149, 1
    %v151 = vadd.f32 %v149, %v150
    %v152 = vsel %vm109, %v107, 0.0
    %v153 = vrot.slane %v152, 4
    %v154 = vadd.f32 %v152, %v153
    %v155 = vrot.slane %v154, 2
    %v156 = vadd.f32 %v154, %v155
    %v157 = vrot.slane %v156, 1
    %v158 = vadd.f32 %v156, %v157
    %v159 = vsel %vm109, %v108, 0.0
    %v160 = vrot.slane %v159, 4
    %v161 = vadd.f32 %v159, %v160
    %v162 = vrot.slane %v161, 2
    %v163 = vadd.f32 %v161, %v162
    %v164 = vrot.slane %v163, 1
    %v165 = vadd.f32 %v163, %v164
    %v166 = vrcp.pop 8.0
    %v167 = vmul.f32 %v116, %v166
    %v168 = vmul.f32 %v123, %v166
    %v169 = vmul.f32 %v130, %v166
    %v170 = vmul.f32 %v137, %v166
    %v171 = vmul.f32 %v144, %v166
    %v172 = vmul.f32 %v151, %v166
    %v173 = vmul.f32 %v158, %v166
    %v174 = vmul.f32 %v165, %v166
    %v175 = vlaneseq
    %v176 = vshrl.u32 %v175, 7
    %v177 = vsub.s32 0, %v176
    %v178 = vrot.slane %v98, %v177
    %181 = vrot.lane.b32.xlu0 %v78, 64
    %v182 = vpop.permute.xlu0 %181
    %183 = vrot.lane.b32.xlu0 %v79, 64
    %v184 = vpop.permute.xlu0 %183
    %188 = vrot.lane.b32.xlu0 %v178, 64
    %v189 = vpop.permute.xlu0 %188
    %v192 = vsel %vm109, %v101, 0
    %v195 = vsel %vm109, %v102, 0
    %v198 = vsel %vm109, %v103, 0
    %v201 = vsel %vm109, %v104, 0
    %v204 = vsel %vm109, %v105, 0
    %v207 = vsel %vm109, %v106, 0
    %v210 = vsel %vm109, %v107, 0
    %v213 = vsel %vm109, %v108, 0
    %215 = vmatprep.subr.mxu0 0.0
    %216 = vmatpush1.msra.mxu0 %v182
    %217 = vmatprep.subr.mxu0 0.0
    %218 = vmatpush1.msra.mxu0 %v184
    %219 = vmatprep.subr.mxu0 0.0
    %220 = vmatpush1.msra.mxu0 0.0
    %221 = vmatprep.subr.mxu0 0.0
    %222 = vmatpush1.msra.mxu0 0.0
    %223 = vmatprep.subr.mxu0 0.0
    %224 = vmatpush1.msra.mxu0 0.0
    %225 = vmatprep.subr.mxu0 0.0
    %226 = vmatpush1.msra.mxu0 0.0
    %227 = vmatprep.subr.mxu0 0.0
    %228 = vmatpush1.msra.mxu0 0.0
    %229 = vmatprep.subr.mxu0 0.0
    %230 = vmatpush1.msra.mxu0 0.0
    %231 = vmatprep.subr.mxu0 0.0
    %232 = vmatpush1.msra.mxu0 0.0
    %233 = vmatprep.subr.mxu0 0.0
    %234 = vmatpush1.msra.mxu0 0.0
    %235 = vmatprep.subr.mxu0 0.0
    %236 = vmatpush1.msra.mxu0 0.0
    %237 = vmatprep.subr.mxu0 0.0
    %238 = vmatpush1.msra.mxu0 0.0
    %239 = vmatprep.subr.mxu0 0.0
    %240 = vmatpush1.msra.mxu0 0.0
    %241 = vmatprep.subr.mxu0 0.0
    %242 = vmatpush1.msra.mxu0 0.0
    %243 = vmatprep.subr.mxu0 0.0
    %244 = vmatpush1.msra.mxu0 0.0
    %245 = vmatprep.subr.mxu0 0.0
    %246 = vmatpush1.msra.mxu0 0.0
    %247 = vmatprep.subr.mxu0 0.0
    %248 = vmatpush1.msra.mxu0 0.0
    %249 = vmatprep.subr.mxu0 0.0
    %250 = vmatpush1.msra.mxu0 0.0
    %251 = vmatprep.subr.mxu0 0.0
    %252 = vmatpush1.msra.mxu0 0.0
    %253 = vmatprep.subr.mxu0 0.0
    %254 = vmatpush1.msra.mxu0 0.0
    %255 = vmatprep.subr.mxu0 0.0
    %256 = vmatpush1.msra.mxu0 0.0
    %257 = vmatprep.subr.mxu0 0.0
    %258 = vmatpush1.msra.mxu0 0.0
    %259 = vmatprep.subr.mxu0 0.0
    %260 = vmatpush1.msra.mxu0 0.0
    %261 = vmatprep.subr.mxu0 0.0
    %262 = vmatpush1.msra.mxu0 0.0
    %263 = vmatprep.subr.mxu0 0.0
    %264 = vmatpush1.msra.mxu0 0.0
    %265 = vmatprep.subr.mxu0 0.0
    %266 = vmatpush1.msra.mxu0 0.0
    %267 = vmatprep.subr.mxu0 0.0
    %268 = vmatpush1.msra.mxu0 0.0
    %269 = vmatprep.subr.mxu0 0.0
    %270 = vmatpush1.msra.mxu0 0.0
    %271 = vmatprep.subr.mxu0 0.0
    %272 = vmatpush1.msra.mxu0 0.0
    %273 = vmatprep.subr.mxu0 0.0
    %274 = vmatpush1.msra.mxu0 0.0
    %275 = vmatprep.subr.mxu0 0.0
    %276 = vmatpush1.msra.mxu0 0.0
    %277 = vmatprep.subr.mxu0 0.0
    %278 = vmatpush1.msra.mxu0 0.0
    %279 = vmatprep.mubr.f32.mxu0 0.0
    %280 = vmatmul.mubr.f32.gmra.mrb[0].mxu0 %v192
    %v281 = vpop.f32.mrb[0].mxu0
    %v282 = vadd.f32 %v189, %v281
    %v283 = vpop.f32.mrb[0].mxu0
    %284 = vmatprep.mubr.f32.mxu0 0.0
    %285 = vmatmul.mubr.f32.gmra.mrb[0].mxu0 %v195
    %v286 = vpop.f32.mrb[0].mxu0
    %v287 = vadd.f32 %v189, %v286
    %v288 = vpop.f32.mrb[0].mxu0
    %289 = vmatprep.mubr.f32.mxu0 0.0
    %290 = vmatmul.mubr.f32.gmra.mrb[0].mxu0 %v198
    %v291 = vpop.f32.mrb[0].mxu0
    %v292 = vadd.f32 %v189, %v291
    %v293 = vpop.f32.mrb[0].mxu0
    %294 = vmatprep.mubr.f32.mxu0 0.0
    %295 = vmatmul.mubr.f32.gmra.mrb[0].mxu0 %v201
    %v296 = vpop.f32.mrb[0].mxu0
    %v297 = vadd.f32 %v189, %v296
    %v298 = vpop.f32.mrb[0].mxu0
    %299 = vmatprep.mubr.f32.mxu0 0.0
    %300 = vmatmul.mubr.f32.gmra.mrb[0].mxu0 %v204
    %v301 = vpop.f32.mrb[0].mxu0
    %v302 = vadd.f32 %v189, %v301
    %v303 = vpop.f32.mrb[0].mxu0
    %304 = vmatprep.mubr.f32.mxu0 0.0
    %305 = vmatmul.mubr.f32.gmra.mrb[0].mxu0 %v207
    %v306 = vpop.f32.mrb[0].mxu0
    %v307 = vadd.f32 %v189, %v306
    %v308 = vpop.f32.mrb[0].mxu0
    %309 = vmatprep.mubr.f32.mxu0 0.0
    %310 = vmatmul.mubr.f32.gmra.mrb[0].mxu0 %v210
    %v311 = vpop.f32.mrb[0].mxu0
    %v312 = vadd.f32 %v189, %v311
    %v313 = vpop.f32.mrb[0].mxu0
    %314 = vmatprep.mubr.f32.mxu0 0.0
    %315 = vmatmul.mubr.f32.gmra.mrb[0].mxu0 %v213
    %v316 = vpop.f32.mrb[0].mxu0
    %v317 = vadd.f32 %v189, %v316
    %v318 = vpop.f32.mrb[0].mxu0
    %319 = vdwg.mxu0
    %v320 = vtanh.pop %v282
    %v321 = vtanh.pop %v287
    %v322 = vtanh.pop %v292
    %v323 = vtanh.pop %v297
    %v324 = vtanh.pop %v302
    %v325 = vtanh.pop %v307
    %v326 = vtanh.pop %v312
    %v327 = vtanh.pop %v317
    %vm328 = vcmask 523264
    %329 = vst.msk [vmem:[#allocation11] sm:$0xff] %vm328, %v320
    %330 = vst.msk [vmem:[#allocation11 + $0x8] sm:$0xff] %vm328, %v321
    %331 = vst.msk [vmem:[#allocation11 + $0x10] sm:$0xff] %vm328, %v322
    %332 = vst.msk [vmem:[#allocation11 + $0x18] sm:$0xff] %vm328, %v323
    %333 = vst.msk [vmem:[#allocation11 + $0x20] sm:$0xff] %vm328, %v324
    %334 = vst.msk [vmem:[#allocation11 + $0x28] sm:$0xff] %vm328, %v325
    %335 = vst.msk [vmem:[#allocation11 + $0x30] sm:$0xff] %vm328, %v326
    %336 = vst.msk [vmem:[#allocation11 + $0x38] sm:$0xff] %vm328, %v327
    %v337 = vld [vmem:[#allocation2] sm:$0xff]
    %vm346 = vcmask 1041409
    %v347 = vsel %vm346, %v168, %v167
    %vm348 = vcmask 1042434
    %v349 = vsel %vm348, %v169, %v347
    %vm350 = vcmask 1043459
    %v351 = vsel %vm350, %v170, %v349
    %vm352 = vcmask 1044484
    %v353 = vsel %vm352, %v171, %v351
    %vm354 = vcmask 1045509
    %v355 = vsel %vm354, %v172, %v353
    %vm356 = vcmask 1046534
    %v357 = vsel %vm356, %v173, %v355
    %vm358 = vcmask 1047559
    %v359 = vsel %vm358, %v174, %v357
    %360 = vrot.lane.b32.xlu0 %v359, 48
    %v361 = vpop.permute.xlu0 %360
    %vm363 = vcmask 392192
    %v364 = vsel %vm363, %v337, %v361
    %v366 = vsel %vm328, %v364, 0
    %368 = vmatprep.subr.mxu0 0.0
    %369 = vmatpush1.msra.mxu0 %v72
    %370 = vmatprep.subr.mxu0 0.0
    %371 = vmatpush1.msra.mxu0 %v73
    %372 = vmatprep.subr.mxu0 0.0
    %373 = vmatpush1.msra.mxu0 %v74
    %374 = vmatprep.subr.mxu0 0.0
    %375 = vmatpush1.msra.mxu0 %v75
    %376 = vmatprep.subr.mxu0 0.0
    %377 = vmatpush1.msra.mxu0 %v76
    %378 = vmatprep.subr.mxu0 0.0
    %379 = vmatpush1.msra.mxu0 %v77
    %380 = vmatprep.subr.mxu0 0.0
    %381 = vmatpush1.msra.mxu0 %v78
    %382 = vmatprep.subr.mxu0 0.0
    %383 = vmatpush1.msra.mxu0 %v79
    %384 = vmatprep.subr.mxu0 0.0
    %385 = vmatpush1.msra.mxu0 0.0
    %386 = vmatprep.subr.mxu0 0.0
    %387 = vmatpush1.msra.mxu0 0.0
    %388 = vmatprep.subr.mxu0 0.0
    %389 = vmatpush1.msra.mxu0 0.0
    %390 = vmatprep.subr.mxu0 0.0
    %391 = vmatpush1.msra.mxu0 0.0
    %392 = vmatprep.subr.mxu0 0.0
    %393 = vmatpush1.msra.mxu0 0.0
    %394 = vmatprep.subr.mxu0 0.0
    %395 = vmatpush1.msra.mxu0 0.0
    %396 = vmatprep.subr.mxu0 0.0
    %397 = vmatpush1.msra.mxu0 0.0
    %398 = vmatprep.subr.mxu0 0.0
    %399 = vmatpush1.msra.mxu0 0.0
    %400 = vmatprep.subr.mxu0 0.0
    %401 = vmatpush1.msra.mxu0 0.0
    %402 = vmatprep.subr.mxu0 0.0
    %403 = vmatpush1.msra.mxu0 0.0
    %404 = vmatprep.subr.mxu0 0.0
    %405 = vmatpush1.msra.mxu0 0.0
    %406 = vmatprep.subr.mxu0 0.0
    %407 = vmatpush1.msra.mxu0 0.0
    %408 = vmatprep.subr.mxu0 0.0
    %409 = vmatpush1.msra.mxu0 0.0
    %410 = vmatprep.subr.mxu0 0.0
    %411 = vmatpush1.msra.mxu0 0.0
    %412 = vmatprep.subr.mxu0 0.0
    %413 = vmatpush1.msra.mxu0 0.0
    %414 = vmatprep.subr.mxu0 0.0
    %415 = vmatpush1.msra.mxu0 0.0
    %416 = vmatprep.subr.mxu0 0.0
    %417 = vmatpush1.msra.mxu0 0.0
    %418 = vmatprep.subr.mxu0 0.0
    %419 = vmatpush1.msra.mxu0 0.0
    %420 = vmatprep.subr.mxu0 0.0
    %421 = vmatpush1.msra.mxu0 0.0
    %422 = vmatprep.subr.mxu0 0.0
    %423 = vmatpush1.msra.mxu0 0.0
    %424 = vmatprep.subr.mxu0 0.0
    %425 = vmatpush1.msra.mxu0 0.0
    %426 = vmatprep.subr.mxu0 0.0
    %427 = vmatpush1.msra.mxu0 0.0
    %428 = vmatprep.subr.mxu0 0.0
    %429 = vmatpush1.msra.mxu0 0.0
    %430 = vmatprep.subr.mxu0 0.0
    %431 = vmatpush1.msra.mxu0 0.0
    %432 = vmatprep.mubr.f32.mxu0 0.0
    %433 = vmatmul.mubr.f32.gmra.mrb[0].mxu0 %v366
    %v434 = vpop.f32.mrb[0].mxu0
    %v435 = vadd.f32 %v178, %v434
    %v436 = vpop.f32.mrb[0].mxu0
    %437 = vdwg.mxu0
    %v438 = vtanh.pop %v435
    %v439 = vlaneseq
    %v440 = vshrl.u32 %v439, 7
    %v441 = vsub.s32 0, %v440
    %v442 = vrot.slane %v99, %v441
    %443 = vmatprep.subr.mxu0 0.0
    %444 = vmatpush1.msra.mxu0 %v80
    %445 = vmatprep.subr.mxu0 0.0
    %446 = vmatpush1.msra.mxu0 %v81
    %447 = vmatprep.subr.mxu0 0.0
    %448 = vmatpush1.msra.mxu0 %v82
    %449 = vmatprep.subr.mxu0 0.0
    %450 = vmatpush1.msra.mxu0 %v83
    %451 = vmatprep.subr.mxu0 0.0
    %452 = vmatpush1.msra.mxu0 %v84
    %453 = vmatprep.subr.mxu0 0.0
    %454 = vmatpush1.msra.mxu0 %v85
    %455 = vmatprep.subr.mxu0 0.0
    %456 = vmatpush1.msra.mxu0 %v86
    %457 = vmatprep.subr.mxu0 0.0
    %458 = vmatpush1.msra.mxu0 %v87
    %459 = vmatprep.subr.mxu0 0.0
    %460 = vmatpush1.msra.mxu0 %v88
    %461 = vmatprep.subr.mxu0 0.0
    %462 = vmatpush1.msra.mxu0 %v89
    %463 = vmatprep.subr.mxu0 0.0
    %464 = vmatpush1.msra.mxu0 %v90
    %465 = vmatprep.subr.mxu0 0.0
    %466 = vmatpush1.msra.mxu0 %v91
    %467 = vmatprep.subr.mxu0 0.0
    %468 = vmatpush1.msra.mxu0 %v92
    %469 = vmatprep.subr.mxu0 0.0
    %470 = vmatpush1.msra.mxu0 %v93
    %471 = vmatprep.subr.mxu0 0.0
    %472 = vmatpush1.msra.mxu0 %v94
    %473 = vmatprep.subr.mxu0 0.0
    %474 = vmatpush1.msra.mxu0 %v95
    %475 = vmatprep.subr.mxu0 0.0
    %476 = vmatpush1.msra.mxu0 0.0
    %477 = vmatprep.subr.mxu0 0.0
    %478 = vmatpush1.msra.mxu0 0.0
    %479 = vmatprep.subr.mxu0 0.0
    %480 = vmatpush1.msra.mxu0 0.0
    %481 = vmatprep.subr.mxu0 0.0
    %482 = vmatpush1.msra.mxu0 0.0
    %483 = vmatprep.subr.mxu0 0.0
    %484 = vmatpush1.msra.mxu0 0.0
    %485 = vmatprep.subr.mxu0 0.0
    %486 = vmatpush1.msra.mxu0 0.0
    %487 = vmatprep.subr.mxu0 0.0
    %488 = vmatpush1.msra.mxu0 0.0
    %489 = vmatprep.subr.mxu0 0.0
    %490 = vmatpush1.msra.mxu0 0.0
    %491 = vmatprep.subr.mxu0 0.0
    %492 = vmatpush1.msra.mxu0 0.0
    %493 = vmatprep.subr.mxu0 0.0
    %494 = vmatpush1.msra.mxu0 0.0
    %495 = vmatprep.subr.mxu0 0.0
    %496 = vmatpush1.msra.mxu0 0.0
    %497 = vmatprep.subr.mxu0 0.0
    %498 = vmatpush1.msra.mxu0 0.0
    %499 = vmatprep.subr.mxu0 0.0
    %500 = vmatpush1.msra.mxu0 0.0
    %501 = vmatprep.subr.mxu0 0.0
    %502 = vmatpush1.msra.mxu0 0.0
    %503 = vmatprep.subr.mxu0 0.0
    %504 = vmatpush1.msra.mxu0 0.0
    %505 = vmatprep.subr.mxu0 0.0
    %506 = vmatpush1.msra.mxu0 0.0
    %507 = vmatprep.mubr.f32.mxu0 0.0
    %508 = vmatmul.mubr.f32.gmra.mrb[0].mxu0 %v438
    %v509 = vpop.f32.mrb[0].mxu0
    %v510 = vadd.f32 %v442, %v509
    %v511 = vpop.f32.mrb[0].mxu0
    %512 = vdwg.mxu0
    %v513 = vmul.f32 %v510, 0.5
    %v514 = vmul.f32 %v513, 1.442695
    %v515 = vpow.pop %v514
    %v516 = vld [vmem:[#allocation7] sm:$0xff]
    %518 = vrot.lane.b32.xlu0 %v515, 112
    %v519 = vpop.permute.xlu0 %518
    %v521 = vmul.f32 %v516, %v519
    %v522 = vadd.f32 %v510, %v521
    %v523 = vlaneseq
    %v524 = vshrl.u32 %v523, 7
    %v525 = vsub.s32 0, %v524
    %v526 = vrot.slane %v100, %v525
    %v528 = vsel %vm109, %v522, 0
    %530 = vmatprep.subr.mxu0 0.0
    %531 = vmatpush1.msra.mxu0 %v96
    %532 = vmatprep.subr.mxu0 0.0
    %533 = vmatpush1.msra.mxu0 %v97
    %534 = vmatprep.subr.mxu0 0.0
    %535 = vmatpush1.msra.mxu0 0.0
    %536 = vmatprep.subr.mxu0 0.0
    %537 = vmatpush1.msra.mxu0 0.0
    %538 = vmatprep.subr.mxu0 0.0
    %539 = vmatpush1.msra.mxu0 0.0
    %540 = vmatprep.subr.mxu0 0.0
    %541 = vmatpush1.msra.mxu0 0.0
    %542 = vmatprep.subr.mxu0 0.0
    %543 = vmatpush1.msra.mxu0 0.0
    %544 = vmatprep.subr.mxu0 0.0
    %545 = vmatpush1.msra.mxu0 0.0
    %546 = vmatprep.subr.mxu0 0.0
    %547 = vmatpush1.msra.mxu0 0.0
    %548 = vmatprep.subr.mxu0 0.0
    %549 = vmatpush1.msra.mxu0 0.0
    %550 = vmatprep.subr.mxu0 0.0
    %551 = vmatpush1.msra.mxu0 0.0
    %552 = vmatprep.subr.mxu0 0.0
    %553 = vmatpush1.msra.mxu0 0.0
    %554 = vmatprep.subr.mxu0 0.0
    %555 = vmatpush1.msra.mxu0 0.0
    %556 = vmatprep.subr.mxu0 0.0
    %557 = vmatpush1.msra.mxu0 0.0
    %558 = vmatprep.subr.mxu0 0.0
    %559 = vmatpush1.msra.mxu0 0.0
    %560 = vmatprep.subr.mxu0 0.0
    %561 = vmatpush1.msra.mxu0 0.0
    %562 = vmatprep.subr.mxu0 0.0
    %563 = vmatpush1.msra.mxu0 0.0
    %564 = vmatprep.subr.mxu0 0.0
    %565 = vmatpush1.msra.mxu0 0.0
    %566 = vmatprep.subr.mxu0 0.0
    %567 = vmatpush1.msra.mxu0 0.0
    %568 = vmatprep.subr.mxu0 0.0
    %569 = vmatpush1.msra.mxu0 0.0
    %570 = vmatprep.subr.mxu0 0.0
    %571 = vmatpush1.msra.mxu0 0.0
    %572 = vmatprep.subr.mxu0 0.0
    %573 = vmatpush1.msra.mxu0 0.0
    %574 = vmatprep.subr.mxu0 0.0
    %575 = vmatpush1.msra.mxu0 0.0
    %576 = vmatprep.subr.mxu0 0.0
    %577 = vmatpush1.msra.mxu0 0.0
    %578 = vmatprep.subr.mxu0 0.0
    %579 = vmatpush1.msra.mxu0 0.0
    %580 = vmatprep.subr.mxu0 0.0
    %581 = vmatpush1.msra.mxu0 0.0
    %582 = vmatprep.subr.mxu0 0.0
    %583 = vmatpush1.msra.mxu0 0.0
    %584 = vmatprep.subr.mxu0 0.0
    %585 = vmatpush1.msra.mxu0 0.0
    %586 = vmatprep.subr.mxu0 0.0
    %587 = vmatpush1.msra.mxu0 0.0
    %588 = vmatprep.subr.mxu0 0.0
    %589 = vmatpush1.msra.mxu0 0.0
    %590 = vmatprep.subr.mxu0 0.0
    %591 = vmatpush1.msra.mxu0 0.0
    %592 = vmatprep.subr.mxu0 0.0
    %593 = vmatpush1.msra.mxu0 0.0
    %594 = vmatprep.mubr.f32.mxu0 0.0
    %595 = vmatmul.mubr.f32.gmra.mrb[0].mxu0 %v528
    %v596 = vpop.f32.mrb[0].mxu0
    %v597 = vadd.f32 %v526, %v596
    %v598 = vpop.f32.mrb[0].mxu0
    %599 = vdwg.mxu0
    %v600 = vadd.f32 %v510, %v597
    %v601 = vmul.f32 %v515, %v515
    %v602 = vadd.f32 %v510, 1.0
    %v603 = vmul.f32 %v510, %v510
    %605 = vrot.lane.b32.xlu0 %v603, 16
    %v606 = vpop.permute.xlu0 %605
    %v608 = vsub.f32 %v602, %v606
    %v609 = vsub.f32 %v608, %v601
    %611 = vrot.lane.b32.xlu0 %v609, 112
    %v612 = vpop.permute.xlu0 %611
    %v614 = vsel %vm109, %v612, 0.0
    %615 = vadd.xlane.f32.xlu0 %v614
    %v616 = vpop.xlane.xlu0 %615
    %v617 = vmul.f32 %v616, -0.5
    %619 = vrot.lane.b32.xlu0 %v510, 16
    %v620 = vpop.permute.xlu0 %619
    %623 = vrot.lane.b32.xlu0 %v597, 48
    %v624 = vpop.permute.xlu0 %623
    %627 = vrot.lane.b32.xlu0 %v600, 48
    %v628 = vpop.permute.xlu0 %627
    %v630 = vsel %vm109, %v522, %v620
    %vm631 = vcmask 261120
    %v632 = vsel %vm631, %v630, %v620
    %v633 = vsel %vm363, %v632, %v624
    %vm634 = vcmask 654336
    %v635 = vsel %vm634, %v633, %v628
    %vm636 = vcmask 916480
    %v637 = vsel %vm636, %v635, %v617
    %vm638 = vcmask 924672
    %v639 = vsel %vm638, %v637, 0.0
    %640 = vst [vmem:[#allocation10] sm:$0xff] %v639
    // Predicated region
    $region34: #{tpu_custom_call.1} parent=1 // pred_check
      _
    $region35: #{tpu_custom_call.1} parent=1 // pred_check_branch
      %642 = sbr.rel (0) target = $region37
    $region36: #{tpu_custom_call.1} parent=1 // pred_region
      %s644 = ssub.s32 128, 128
      %645 = vsyncadd [#allocation4], %s644
      %s647 = sshll.u32 [#allocation10], 4
      %s648 = int_to_ptr.vmem [resolvable:$true] %s647
      %650 = dma.vmem_to_hbm [thread:$0]  %s648, 128, %s4, [#allocation4]
    $region37: #{tpu_custom_call.1} parent=1 // pred_fallthru
      _
    // Predicated region
    $region38: #{tpu_custom_call.1} parent=1 // pred_check
      _
    $region39: #{tpu_custom_call.1} parent=1 // pred_check_branch
      %652 = sbr.rel (0) target = $region41
    $region40: #{tpu_custom_call.1} parent=1 // pred_region
      %s654 = ssub.s32 1024, 1024
      %655 = vsyncadd [#allocation12], %s654
      %s656 = sshll.u32 [#allocation11], 4
      %s657 = int_to_ptr.vmem [resolvable:$true] %s656
      %662 = dma.vmem_to_hbm [thread:$0]  %s657, 1024, %s5, [#allocation12], 128, 128, 8
    $region41: #{tpu_custom_call.1} parent=1 // pred_fallthru
      _
    // Predicated region
    $region42: #{tpu_custom_call.1} parent=1 // pred_check
      _
    $region43: #{tpu_custom_call.1} parent=1 // pred_check_branch
      %664 = sbr.rel (0) target = $region45
    $region44: #{tpu_custom_call.1} parent=1 // pred_region
      %665 = dma.done [#allocation4], 128
    $region45: #{tpu_custom_call.1} parent=1 // pred_fallthru
      _
    // Predicated region
    $region46: #{tpu_custom_call.1} parent=1 // pred_check
      _
    $region47: #{tpu_custom_call.1} parent=1 // pred_check_branch
      %667 = sbr.rel (0) target = $region49
    $region48: #{tpu_custom_call.1} parent=1 // pred_region
      %668 = dma.done [#allocation12], 1024
    $region49: #{tpu_custom_call.1} parent=1 // pred_fallthru
      _
    %669 = vsyncpa [#allocation3], 1
    %670 = vsyncpa [#allocation6], 1
    %671 = vsyncpa [#allocation9], 1
    %672 = vsyncpa [#allocation4], 1
    %673 = vsyncpa [#allocation12], 1

</llo_original>
